<compile_context>
chip_gen: v7x
topology: tpu7x:2x2x1
jax: 0.10.0
libtpu: 0.0.40
codegen_flags: <defaults>
</compile_context>

<pallas_src>
import functools

import jax
import jax.numpy as jnp
from jax.experimental import pallas as pl
from jax.experimental.pallas import tpu as pltpu

KH, KW = 5, 5          # kernel_size=(5, 5)
PAD = 2                # padding=2


def _round_up(n, m):
    return -(-n // m) * m


def _choose_tile_h(H, W, K, itemsize, B, budget_bytes=2 << 20):
    """Largest row-tile TH dividing H whose lane-dense filter block (K, TH*W)
    fits the per-block VMEM budget.  TH*W must be a multiple of 128 unless
    TH == H (full-dim block is always legal).  With a tiny grid, prefer >=2
    spatial tiles so the BlockSpec pipeline has something to overlap."""
    divs = [d for d in range(1, H + 1) if H % d == 0]
    valid = [d for d in divs if (d * W) % 128 == 0 or d == H]
    fitting = [d for d in valid if K * d * W * itemsize <= budget_bytes] or [min(valid)]
    th = max(fitting)
    if B * (H // th) < 4:
        smaller = [d for d in fitting if d < th and (d * W) % 128 == 0]
        if smaller:
            th = max(smaller)
    return th


def dynfilter_kernel(x_ref, f_ref, o_ref, *, C, W, L, WLEN):
    """One (batch, row-tile) grid step.

    x_ref : (1, C, Lx)  H-padded, spatially flattened input (resident per batch)
    f_ref : (1, K, L)   per-pixel filters for this tile, lane-dense, K = C*25
    o_ref : (1, 1, L)   lane-dense output tile, L = TH*W (multiple of 128)
    """
    t = pl.program_id(1)
    # L % 128 == 0 whenever there is more than one spatial tile; otherwise t==0.
    start = pl.multiple_of(t * L, 128)

    # Column index of every flattened output position (tile rows are W apart).
    col = jax.lax.broadcasted_iota(jnp.int32, (1, L), 1) % W

    def body(c, parts):
        parts = list(parts)
        # One aligned window load per input channel; all 25 taps are derived
        # from it with XLU rolls.  Circular-wrap artifacts only ever land on
        # columns that the dj-masks zero out below.
        win = x_ref[0, pl.ds(c, 1), pl.ds(start, WLEN)].astype(jnp.float32)  # (1, WLEN)
        for di in range(KH):
            for dj in range(KW):
                d = di * W + (dj - PAD)          # flat shift of this tap
                tap = win if d == 0 else pltpu.roll(win, (-d) % WLEN, axis=1)
                k = c * (KH * KW) + di * KW + dj
                fk = f_ref[0, pl.ds(k, 1), :].astype(jnp.float32)            # (1, L)
                parts[dj] = parts[dj] + tap[:, :L] * fk
        return tuple(parts)

    init = tuple(jnp.zeros((1, L), jnp.float32) for _ in range(KW))
    parts = jax.lax.fori_loop(0, C, body, init)

    # Apply the implicit zero W-padding: taps whose column offset leaves the
    # image contribute nothing.  The mask depends only on dj, so it is applied
    # once per dj to the partial sums (5 selects per tile, not per tap).
    acc = parts[PAD]
    for dj in range(KW):
        if dj == PAD:
            continue
        off = dj - PAD
        valid = (col + off >= 0) & (col + off < W)
        acc = acc + jnp.where(valid, parts[dj], 0.0)

    o_ref[...] = acc[None].astype(o_ref.dtype)


def dyn_filter(x, filt):
    """Pallas implementation of DynFilter.forward(x, filter)."""
    B, C, H, W = x.shape
    K = C * KH * KW
    assert filt.shape == (B, K, H, W), filt.shape

    TH = _choose_tile_h(H, W, K, jnp.dtype(filt.dtype).itemsize, B)
    n_t = H // TH
    L = TH * W
    # Per-channel x window: TH rows plus a 2*PAD-row halo, rounded up to whole
    # 128-lane tiles so in-kernel rolls operate on full lanes.
    halo = 2 * PAD * W
    WLEN = _round_up(L + halo, 128)
    Lx = (n_t - 1) * L + WLEN

    # Zero-pad H by PAD (W padding handled in-kernel via masks), flatten the
    # spatial dims, and append the halo tail.  x is ~4% of total traffic; the
    # dominant filter tensor is only reshaped (free, trailing-dim reshape).
    xh = jnp.pad(x, ((0, 0), (0, 0), (PAD, PAD), (0, 0)))
    xf = xh.reshape(B, C, (H + 2 * PAD) * W)
    xf = jnp.pad(xf, ((0, 0), (0, 0), (0, Lx - xf.shape[-1])))
    ff = filt.reshape(B, K, H * W)

    kernel = functools.partial(dynfilter_kernel, C=C, W=W, L=L, WLEN=WLEN)
    out_flat = pl.pallas_call(
        kernel,
        out_shape=jax.ShapeDtypeStruct((B, 1, H * W), x.dtype),
        grid_spec=pltpu.PrefetchScalarGridSpec(
            num_scalar_prefetch=0,
            grid=(B, n_t),
            in_specs=[
                # x: full per-batch block, constant across the spatial axis
                # (stays resident; re-DMA'd only when b changes).
                pl.BlockSpec((1, C, Lx), lambda b, t: (b, 0, 0)),
                # filter: lane-dense stream, pipelined across (b, t).
                pl.BlockSpec((1, K, L), lambda b, t: (b, 0, t)),
            ],
            out_specs=pl.BlockSpec((1, 1, L), lambda b, t: (b, 0, t)),
        ),
        compiler_params=pltpu.CompilerParams(
            dimension_semantics=("parallel", "parallel")),
    )(xf, ff)
    return out_flat.reshape(B, 1, H, W)


def dyn_filter_ref(x, filt):
    """Pure-JAX reference matching the PyTorch forward exactly."""
    B, C, H, W = x.shape
    xp = jnp.pad(x, ((0, 0), (0, 0), (PAD, PAD), (PAD, PAD)))
    taps = []
    for c in range(C):
        for i in range(KH):
            for j in range(KW):
                taps.append(xp[:, c, i:i + H, j:j + W])
    taps = jnp.stack(taps, axis=1)                      # (B, C*KH*KW, H, W)
    return jnp.sum(taps * filt, axis=1, keepdims=True)  # (B, 1, H, W)


if __name__ == "__main__":
    key = jax.random.PRNGKey(0)
    kx, kf = jax.random.split(key)
    B, C, H, W = 2, 4, 16, 16
    x = jax.random.normal(kx, (B, C, H, W), dtype=jnp.float32)
    filt = jax.random.normal(kf, (B, C * KH * KW, H, W), dtype=jnp.float32)

    out = jax.block_until_ready(dyn_filter(x, filt))
    ref = dyn_filter_ref(x, filt)

    assert out.shape == (B, 1, H, W), out.shape
    assert jnp.allclose(out, ref, atol=1e-5, rtol=1e-5), \
        float(jnp.max(jnp.abs(out - ref)))
    print("KERNEL_OK")
</pallas_src>

<mosaic_0001>
module attributes {stable_mosaic.version = 11 : i64} {
  func.func @dynfilter_kernel(%arg0: i32, %arg1: i32, %arg2: memref<1x4x384xf32, #tpu.memory_space<vmem>>, %arg3: memref<1x100x128xf32, #tpu.memory_space<vmem>>, %arg4: memref<1x1x128xf32, #tpu.memory_space<vmem>>) attributes {dimension_semantics = [#tpu.dimension_semantics<parallel>, #tpu.dimension_semantics<parallel>], iteration_bounds = array<i64: 2, 2>, scalar_prefetch = 0 : i64, scratch_operands = 0 : i64, tpu.core_type = #tpu.core_type<tc>, window_params = [{transform_indices = @transform_0, window_bounds = array<i64: 1, 4, 384>}, {transform_indices = @transform_1, window_bounds = array<i64: 1, 100, 128>}, {transform_indices = @transform_2, window_bounds = array<i64: 1, 1, 128>}]} {
    %c128_i32 = arith.constant 128 : i32
    %0 = arith.muli %arg1, %c128_i32 : i32
    %1 = tpu.assume_multiple %0, 128 : i32
    %2 = tpu.iota {dimensions = array<i32: 1>} : vector<1x128xi32>
    %c16_i32 = arith.constant 16 : i32
    %c0_i32 = arith.constant 0 : i32
    %3 = arith.cmpi eq, %c16_i32, %c0_i32 : i32
    %c1_i32 = arith.constant 1 : i32
    %4 = arith.select %3, %c1_i32, %c16_i32 : i32
    %5 = vector.broadcast %4 : i32 to vector<1x128xi32>
    %6 = arith.remsi %2, %5 : vector<1x128xi32>
    %c0_i32_0 = arith.constant 0 : i32
    %7 = vector.broadcast %c0_i32_0 : i32 to vector<1x128xi32>
    %8 = arith.cmpi ne, %6, %7 : vector<1x128xi32>
    %c0_i32_1 = arith.constant 0 : i32
    %9 = vector.broadcast %c0_i32_1 : i32 to vector<1x128xi32>
    %10 = arith.cmpi slt, %6, %9 : vector<1x128xi32>
    %c0_i32_2 = arith.constant 0 : i32
    %11 = arith.cmpi slt, %4, %c0_i32_2 : i32
    %12 = vector.broadcast %11 : i1 to vector<1x128xi1>
    %13 = vector.broadcast %12 : vector<1x128xi1> to vector<1x128xi1>
    %14 = arith.xori %10, %13 : vector<1x128xi1>
    %15 = arith.andi %14, %8 : vector<1x128xi1>
    %16 = vector.broadcast %4 : i32 to vector<1x128xi32>
    %17 = arith.addi %6, %16 : vector<1x128xi32>
    %18 = arith.select %15, %17, %6 : vector<1x128xi1>, vector<1x128xi32>
    %cst = arith.constant 0.000000e+00 : f32
    %19 = vector.broadcast %cst : f32 to vector<1x128xf32>
    %cst_3 = arith.constant 0.000000e+00 : f32
    %20 = vector.broadcast %cst_3 : f32 to vector<1x128xf32>
    %cst_4 = arith.constant 0.000000e+00 : f32
    %21 = vector.broadcast %cst_4 : f32 to vector<1x128xf32>
    %cst_5 = arith.constant 0.000000e+00 : f32
    %22 = vector.broadcast %cst_5 : f32 to vector<1x128xf32>
    %cst_6 = arith.constant 0.000000e+00 : f32
    %23 = vector.broadcast %cst_6 : f32 to vector<1x128xf32>
    %c0_i32_7 = arith.constant 0 : i32
    %c4_i32 = arith.constant 4 : i32
    %24 = arith.addi %c0_i32_7, %c4_i32 : i32
    %c1_i32_8 = arith.constant 1 : i32
    %25:5 = scf.for %arg5 = %c0_i32_7 to %24 step %c1_i32_8 iter_args(%arg6 = %19, %arg7 = %20, %arg8 = %21, %arg9 = %22, %arg10 = %23) -> (vector<1x128xf32>, vector<1x128xf32>, vector<1x128xf32>, vector<1x128xf32>, vector<1x128xf32>)  : i32 {
      %c0_29 = arith.constant 0 : index
      %76 = arith.index_cast %arg5 : i32 to index
      %77 = arith.index_cast %1 : i32 to index
      %78 = vector.load %arg2[%c0_29, %76, %77] : memref<1x4x384xf32, #tpu.memory_space<vmem>>, vector<1x1x256xf32>
      %79 = vector.shape_cast %78 : vector<1x1x256xf32> to vector<1x256xf32>
      %c2_i32_30 = arith.constant 2 : i32
      %80 = tpu.dynamic_rotate %79 by %c2_i32_30 dim 1 : vector<1x256xf32>, i32 -> vector<1x256xf32>
      %c25_i32 = arith.constant 25 : i32
      %81 = arith.muli %arg5, %c25_i32 : i32
      %c0_i32_31 = arith.constant 0 : i32
      %82 = arith.addi %81, %c0_i32_31 : i32
      %c0_i32_32 = arith.constant 0 : i32
      %83 = arith.addi %82, %c0_i32_32 : i32
      %c0_33 = arith.constant 0 : index
      %84 = arith.index_cast %83 : i32 to index
      %c0_34 = arith.constant 0 : index
      %85 = vector.load %arg3[%c0_33, %84, %c0_34] : memref<1x100x128xf32, #tpu.memory_space<vmem>>, vector<1x1x128xf32>
      %86 = vector.shape_cast %85 : vector<1x1x128xf32> to vector<1x128xf32>
      %87 = vector.extract_strided_slice %80 {offsets = [0, 0], sizes = [1, 128], strides = [1, 1]} : vector<1x256xf32> to vector<1x128xf32>
      %88 = arith.mulf %87, %86 : vector<1x128xf32>
      %89 = arith.addf %arg6, %88 : vector<1x128xf32>
      %c1_i32_35 = arith.constant 1 : i32
      %90 = tpu.dynamic_rotate %79 by %c1_i32_35 dim 1 : vector<1x256xf32>, i32 -> vector<1x256xf32>
      %c25_i32_36 = arith.constant 25 : i32
      %91 = arith.muli %arg5, %c25_i32_36 : i32
      %c0_i32_37 = arith.constant 0 : i32
      %92 = arith.addi %91, %c0_i32_37 : i32
      %c1_i32_38 = arith.constant 1 : i32
      %93 = arith.addi %92, %c1_i32_38 : i32
      %c0_39 = arith.constant 0 : index
      %94 = arith.index_cast %93 : i32 to index
      %c0_40 = arith.constant 0 : index
      %95 = vector.load %arg3[%c0_39, %94, %c0_40] : memref<1x100x128xf32, #tpu.memory_space<vmem>>, vector<1x1x128xf32>
      %96 = vector.shape_cast %95 : vector<1x1x128xf32> to vector<1x128xf32>
      %97 = vector.extract_strided_slice %90 {offsets = [0, 0], sizes = [1, 128], strides = [1, 1]} : vector<1x256xf32> to vector<1x128xf32>
      %98 = arith.mulf %97, %96 : vector<1x128xf32>
      %99 = arith.addf %arg7, %98 : vector<1x128xf32>
      %c25_i32_41 = arith.constant 25 : i32
      %100 = arith.muli %arg5, %c25_i32_41 : i32
      %c0_i32_42 = arith.constant 0 : i32
      %101 = arith.addi %100, %c0_i32_42 : i32
      %c2_i32_43 = arith.constant 2 : i32
      %102 = arith.addi %101, %c2_i32_43 : i32
      %c0_44 = arith.constant 0 : index
      %103 = arith.index_cast %102 : i32 to index
      %c0_45 = arith.constant 0 : index
      %104 = vector.load %arg3[%c0_44, %103, %c0_45] : memref<1x100x128xf32, #tpu.memory_space<vmem>>, vector<1x1x128xf32>
      %105 = vector.shape_cast %104 : vector<1x1x128xf32> to vector<1x128xf32>
      %106 = vector.extract_strided_slice %79 {offsets = [0, 0], sizes = [1, 128], strides = [1, 1]} : vector<1x256xf32> to vector<1x128xf32>
      %107 = arith.mulf %106, %105 : vector<1x128xf32>
      %108 = arith.addf %arg8, %107 : vector<1x128xf32>
      %c255_i32 = arith.constant 255 : i32
      %109 = tpu.dynamic_rotate %79 by %c255_i32 dim 1 : vector<1x256xf32>, i32 -> vector<1x256xf32>
      %c25_i32_46 = arith.constant 25 : i32
      %110 = arith.muli %arg5, %c25_i32_46 : i32
      %c0_i32_47 = arith.constant 0 : i32
      %111 = arith.addi %110, %c0_i32_47 : i32
      %c3_i32 = arith.constant 3 : i32
      %112 = arith.addi %111, %c3_i32 : i32
      %c0_48 = arith.constant 0 : index
      %113 = arith.index_cast %112 : i32 to index
      %c0_49 = arith.constant 0 : index
      %114 = vector.load %arg3[%c0_48, %113, %c0_49] : memref<1x100x128xf32, #tpu.memory_space<vmem>>, vector<1x1x128xf32>
      %115 = vector.shape_cast %114 : vector<1x1x128xf32> to vector<1x128xf32>
      %116 = vector.extract_strided_slice %109 {offsets = [0, 0], sizes = [1, 128], strides = [1, 1]} : vector<1x256xf32> to vector<1x128xf32>
      %117 = arith.mulf %116, %115 : vector<1x128xf32>
      %118 = arith.addf %arg9, %117 : vector<1x128xf32>
      %c254_i32 = arith.constant 254 : i32
      %119 = tpu.dynamic_rotate %79 by %c254_i32 dim 1 : vector<1x256xf32>, i32 -> vector<1x256xf32>
      %c25_i32_50 = arith.constant 25 : i32
      %120 = arith.muli %arg5, %c25_i32_50 : i32
      %c0_i32_51 = arith.constant 0 : i32
      %121 = arith.addi %120, %c0_i32_51 : i32
      %c4_i32_52 = arith.constant 4 : i32
      %122 = arith.addi %121, %c4_i32_52 : i32
      %c0_53 = arith.constant 0 : index
      %123 = arith.index_cast %122 : i32 to index
      %c0_54 = arith.constant 0 : index
      %124 = vector.load %arg3[%c0_53, %123, %c0_54] : memref<1x100x128xf32, #tpu.memory_space<vmem>>, vector<1x1x128xf32>
      %125 = vector.shape_cast %124 : vector<1x1x128xf32> to vector<1x128xf32>
      %126 = vector.extract_strided_slice %119 {offsets = [0, 0], sizes = [1, 128], strides = [1, 1]} : vector<1x256xf32> to vector<1x128xf32>
      %127 = arith.mulf %126, %125 : vector<1x128xf32>
      %128 = arith.addf %arg10, %127 : vector<1x128xf32>
      %c242_i32 = arith.constant 242 : i32
      %129 = tpu.dynamic_rotate %79 by %c242_i32 dim 1 : vector<1x256xf32>, i32 -> vector<1x256xf32>
      %c25_i32_55 = arith.constant 25 : i32
      %130 = arith.muli %arg5, %c25_i32_55 : i32
      %c5_i32 = arith.constant 5 : i32
      %131 = arith.addi %130, %c5_i32 : i32
      %c0_i32_56 = arith.constant 0 : i32
      %132 = arith.addi %131, %c0_i32_56 : i32
      %c0_57 = arith.constant 0 : index
      %133 = arith.index_cast %132 : i32 to index
      %c0_58 = arith.constant 0 : index
      %134 = vector.load %arg3[%c0_57, %133, %c0_58] : memref<1x100x128xf32, #tpu.memory_space<vmem>>, vector<1x1x128xf32>
      %135 = vector.shape_cast %134 : vector<1x1x128xf32> to vector<1x128xf32>
      %136 = vector.extract_strided_slice %129 {offsets = [0, 0], sizes = [1, 128], strides = [1, 1]} : vector<1x256xf32> to vector<1x128xf32>
      %137 = arith.mulf %136, %135 : vector<1x128xf32>
      %138 = arith.addf %89, %137 : vector<1x128xf32>
      %c241_i32 = arith.constant 241 : i32
      %139 = tpu.dynamic_rotate %79 by %c241_i32 dim 1 : vector<1x256xf32>, i32 -> vector<1x256xf32>
      %c25_i32_59 = arith.constant 25 : i32
      %140 = arith.muli %arg5, %c25_i32_59 : i32
      %c5_i32_60 = arith.constant 5 : i32
      %141 = arith.addi %140, %c5_i32_60 : i32
      %c1_i32_61 = arith.constant 1 : i32
      %142 = arith.addi %141, %c1_i32_61 : i32
      %c0_62 = arith.constant 0 : index
      %143 = arith.index_cast %142 : i32 to index
      %c0_63 = arith.constant 0 : index
      %144 = vector.load %arg3[%c0_62, %143, %c0_63] : memref<1x100x128xf32, #tpu.memory_space<vmem>>, vector<1x1x128xf32>
      %145 = vector.shape_cast %144 : vector<1x1x128xf32> to vector<1x128xf32>
      %146 = vector.extract_strided_slice %139 {offsets = [0, 0], sizes = [1, 128], strides = [1, 1]} : vector<1x256xf32> to vector<1x128xf32>
      %147 = arith.mulf %146, %145 : vector<1x128xf32>
      %148 = arith.addf %99, %147 : vector<1x128xf32>
      %c240_i32 = arith.constant 240 : i32
      %149 = tpu.dynamic_rotate %79 by %c240_i32 dim 1 : vector<1x256xf32>, i32 -> vector<1x256xf32>
      %c25_i32_64 = arith.constant 25 : i32
      %150 = arith.muli %arg5, %c25_i32_64 : i32
      %c5_i32_65 = arith.constant 5 : i32
      %151 = arith.addi %150, %c5_i32_65 : i32
      %c2_i32_66 = arith.constant 2 : i32
      %152 = arith.addi %151, %c2_i32_66 : i32
      %c0_67 = arith.constant 0 : index
      %153 = arith.index_cast %152 : i32 to index
      %c0_68 = arith.constant 0 : index
      %154 = vector.load %arg3[%c0_67, %153, %c0_68] : memref<1x100x128xf32, #tpu.memory_space<vmem>>, vector<1x1x128xf32>
      %155 = vector.shape_cast %154 : vector<1x1x128xf32> to vector<1x128xf32>
      %156 = vector.extract_strided_slice %149 {offsets = [0, 0], sizes = [1, 128], strides = [1, 1]} : vector<1x256xf32> to vector<1x128xf32>
      %157 = arith.mulf %156, %155 : vector<1x128xf32>
      %158 = arith.addf %108, %157 : vector<1x128xf32>
      %c239_i32 = arith.constant 239 : i32
      %159 = tpu.dynamic_rotate %79 by %c239_i32 dim 1 : vector<1x256xf32>, i32 -> vector<1x256xf32>
      %c25_i32_69 = arith.constant 25 : i32
      %160 = arith.muli %arg5, %c25_i32_69 : i32
      %c5_i32_70 = arith.constant 5 : i32
      %161 = arith.addi %160, %c5_i32_70 : i32
      %c3_i32_71 = arith.constant 3 : i32
      %162 = arith.addi %161, %c3_i32_71 : i32
      %c0_72 = arith.constant 0 : index
      %163 = arith.index_cast %162 : i32 to index
      %c0_73 = arith.constant 0 : index
      %164 = vector.load %arg3[%c0_72, %163, %c0_73] : memref<1x100x128xf32, #tpu.memory_space<vmem>>, vector<1x1x128xf32>
      %165 = vector.shape_cast %164 : vector<1x1x128xf32> to vector<1x128xf32>
      %166 = vector.extract_strided_slice %159 {offsets = [0, 0], sizes = [1, 128], strides = [1, 1]} : vector<1x256xf32> to vector<1x128xf32>
      %167 = arith.mulf %166, %165 : vector<1x128xf32>
      %168 = arith.addf %118, %167 : vector<1x128xf32>
      %c238_i32 = arith.constant 238 : i32
      %169 = tpu.dynamic_rotate %79 by %c238_i32 dim 1 : vector<1x256xf32>, i32 -> vector<1x256xf32>
      %c25_i32_74 = arith.constant 25 : i32
      %170 = arith.muli %arg5, %c25_i32_74 : i32
      %c5_i32_75 = arith.constant 5 : i32
      %171 = arith.addi %170, %c5_i32_75 : i32
      %c4_i32_76 = arith.constant 4 : i32
      %172 = arith.addi %171, %c4_i32_76 : i32
      %c0_77 = arith.constant 0 : index
      %173 = arith.index_cast %172 : i32 to index
      %c0_78 = arith.constant 0 : index
      %174 = vector.load %arg3[%c0_77, %173, %c0_78] : memref<1x100x128xf32, #tpu.memory_space<vmem>>, vector<1x1x128xf32>
      %175 = vector.shape_cast %174 : vector<1x1x128xf32> to vector<1x128xf32>
      %176 = vector.extract_strided_slice %169 {offsets = [0, 0], sizes = [1, 128], strides = [1, 1]} : vector<1x256xf32> to vector<1x128xf32>
      %177 = arith.mulf %176, %175 : vector<1x128xf32>
      %178 = arith.addf %128, %177 : vector<1x128xf32>
      %c226_i32 = arith.constant 226 : i32
      %179 = tpu.dynamic_rotate %79 by %c226_i32 dim 1 : vector<1x256xf32>, i32 -> vector<1x256xf32>
      %c25_i32_79 = arith.constant 25 : i32
      %180 = arith.muli %arg5, %c25_i32_79 : i32
      %c10_i32 = arith.constant 10 : i32
      %181 = arith.addi %180, %c10_i32 : i32
      %c0_i32_80 = arith.constant 0 : i32
      %182 = arith.addi %181, %c0_i32_80 : i32
      %c0_81 = arith.constant 0 : index
      %183 = arith.index_cast %182 : i32 to index
      %c0_82 = arith.constant 0 : index
      %184 = vector.load %arg3[%c0_81, %183, %c0_82] : memref<1x100x128xf32, #tpu.memory_space<vmem>>, vector<1x1x128xf32>
      %185 = vector.shape_cast %184 : vector<1x1x128xf32> to vector<1x128xf32>
      %186 = vector.extract_strided_slice %179 {offsets = [0, 0], sizes = [1, 128], strides = [1, 1]} : vector<1x256xf32> to vector<1x128xf32>
      %187 = arith.mulf %186, %185 : vector<1x128xf32>
      %188 = arith.addf %138, %187 : vector<1x128xf32>
      %c225_i32 = arith.constant 225 : i32
      %189 = tpu.dynamic_rotate %79 by %c225_i32 dim 1 : vector<1x256xf32>, i32 -> vector<1x256xf32>
      %c25_i32_83 = arith.constant 25 : i32
      %190 = arith.muli %arg5, %c25_i32_83 : i32
      %c10_i32_84 = arith.constant 10 : i32
      %191 = arith.addi %190, %c10_i32_84 : i32
      %c1_i32_85 = arith.constant 1 : i32
      %192 = arith.addi %191, %c1_i32_85 : i32
      %c0_86 = arith.constant 0 : index
      %193 = arith.index_cast %192 : i32 to index
      %c0_87 = arith.constant 0 : index
      %194 = vector.load %arg3[%c0_86, %193, %c0_87] : memref<1x100x128xf32, #tpu.memory_space<vmem>>, vector<1x1x128xf32>
      %195 = vector.shape_cast %194 : vector<1x1x128xf32> to vector<1x128xf32>
      %196 = vector.extract_strided_slice %189 {offsets = [0, 0], sizes = [1, 128], strides = [1, 1]} : vector<1x256xf32> to vector<1x128xf32>
      %197 = arith.mulf %196, %195 : vector<1x128xf32>
      %198 = arith.addf %148, %197 : vector<1x128xf32>
      %c224_i32 = arith.constant 224 : i32
      %199 = tpu.dynamic_rotate %79 by %c224_i32 dim 1 : vector<1x256xf32>, i32 -> vector<1x256xf32>
      %c25_i32_88 = arith.constant 25 : i32
      %200 = arith.muli %arg5, %c25_i32_88 : i32
      %c10_i32_89 = arith.constant 10 : i32
      %201 = arith.addi %200, %c10_i32_89 : i32
      %c2_i32_90 = arith.constant 2 : i32
      %202 = arith.addi %201, %c2_i32_90 : i32
      %c0_91 = arith.constant 0 : index
      %203 = arith.index_cast %202 : i32 to index
      %c0_92 = arith.constant 0 : index
      %204 = vector.load %arg3[%c0_91, %203, %c0_92] : memref<1x100x128xf32, #tpu.memory_space<vmem>>, vector<1x1x128xf32>
      %205 = vector.shape_cast %204 : vector<1x1x128xf32> to vector<1x128xf32>
      %206 = vector.extract_strided_slice %199 {offsets = [0, 0], sizes = [1, 128], strides = [1, 1]} : vector<1x256xf32> to vector<1x128xf32>
      %207 = arith.mulf %206, %205 : vector<1x128xf32>
      %208 = arith.addf %158, %207 : vector<1x128xf32>
      %c223_i32 = arith.constant 223 : i32
      %209 = tpu.dynamic_rotate %79 by %c223_i32 dim 1 : vector<1x256xf32>, i32 -> vector<1x256xf32>
      %c25_i32_93 = arith.constant 25 : i32
      %210 = arith.muli %arg5, %c25_i32_93 : i32
      %c10_i32_94 = arith.constant 10 : i32
      %211 = arith.addi %210, %c10_i32_94 : i32
      %c3_i32_95 = arith.constant 3 : i32
      %212 = arith.addi %211, %c3_i32_95 : i32
      %c0_96 = arith.constant 0 : index
      %213 = arith.index_cast %212 : i32 to index
      %c0_97 = arith.constant 0 : index
      %214 = vector.load %arg3[%c0_96, %213, %c0_97] : memref<1x100x128xf32, #tpu.memory_space<vmem>>, vector<1x1x128xf32>
      %215 = vector.shape_cast %214 : vector<1x1x128xf32> to vector<1x128xf32>
      %216 = vector.extract_strided_slice %209 {offsets = [0, 0], sizes = [1, 128], strides = [1, 1]} : vector<1x256xf32> to vector<1x128xf32>
      %217 = arith.mulf %216, %215 : vector<1x128xf32>
      %218 = arith.addf %168, %217 : vector<1x128xf32>
      %c222_i32 = arith.constant 222 : i32
      %219 = tpu.dynamic_rotate %79 by %c222_i32 dim 1 : vector<1x256xf32>, i32 -> vector<1x256xf32>
      %c25_i32_98 = arith.constant 25 : i32
      %220 = arith.muli %arg5, %c25_i32_98 : i32
      %c10_i32_99 = arith.constant 10 : i32
      %221 = arith.addi %220, %c10_i32_99 : i32
      %c4_i32_100 = arith.constant 4 : i32
      %222 = arith.addi %221, %c4_i32_100 : i32
      %c0_101 = arith.constant 0 : index
      %223 = arith.index_cast %222 : i32 to index
      %c0_102 = arith.constant 0 : index
      %224 = vector.load %arg3[%c0_101, %223, %c0_102] : memref<1x100x128xf32, #tpu.memory_space<vmem>>, vector<1x1x128xf32>
      %225 = vector.shape_cast %224 : vector<1x1x128xf32> to vector<1x128xf32>
      %226 = vector.extract_strided_slice %219 {offsets = [0, 0], sizes = [1, 128], strides = [1, 1]} : vector<1x256xf32> to vector<1x128xf32>
      %227 = arith.mulf %226, %225 : vector<1x128xf32>
      %228 = arith.addf %178, %227 : vector<1x128xf32>
      %c210_i32 = arith.constant 210 : i32
      %229 = tpu.dynamic_rotate %79 by %c210_i32 dim 1 : vector<1x256xf32>, i32 -> vector<1x256xf32>
      %c25_i32_103 = arith.constant 25 : i32
      %230 = arith.muli %arg5, %c25_i32_103 : i32
      %c15_i32 = arith.constant 15 : i32
      %231 = arith.addi %230, %c15_i32 : i32
      %c0_i32_104 = arith.constant 0 : i32
      %232 = arith.addi %231, %c0_i32_104 : i32
      %c0_105 = arith.constant 0 : index
      %233 = arith.index_cast %232 : i32 to index
      %c0_106 = arith.constant 0 : index
      %234 = vector.load %arg3[%c0_105, %233, %c0_106] : memref<1x100x128xf32, #tpu.memory_space<vmem>>, vector<1x1x128xf32>
      %235 = vector.shape_cast %234 : vector<1x1x128xf32> to vector<1x128xf32>
      %236 = vector.extract_strided_slice %229 {offsets = [0, 0], sizes = [1, 128], strides = [1, 1]} : vector<1x256xf32> to vector<1x128xf32>
      %237 = arith.mulf %236, %235 : vector<1x128xf32>
      %238 = arith.addf %188, %237 : vector<1x128xf32>
      %c209_i32 = arith.constant 209 : i32
      %239 = tpu.dynamic_rotate %79 by %c209_i32 dim 1 : vector<1x256xf32>, i32 -> vector<1x256xf32>
      %c25_i32_107 = arith.constant 25 : i32
      %240 = arith.muli %arg5, %c25_i32_107 : i32
      %c15_i32_108 = arith.constant 15 : i32
      %241 = arith.addi %240, %c15_i32_108 : i32
      %c1_i32_109 = arith.constant 1 : i32
      %242 = arith.addi %241, %c1_i32_109 : i32
      %c0_110 = arith.constant 0 : index
      %243 = arith.index_cast %242 : i32 to index
      %c0_111 = arith.constant 0 : index
      %244 = vector.load %arg3[%c0_110, %243, %c0_111] : memref<1x100x128xf32, #tpu.memory_space<vmem>>, vector<1x1x128xf32>
      %245 = vector.shape_cast %244 : vector<1x1x128xf32> to vector<1x128xf32>
      %246 = vector.extract_strided_slice %239 {offsets = [0, 0], sizes = [1, 128], strides = [1, 1]} : vector<1x256xf32> to vector<1x128xf32>
      %247 = arith.mulf %246, %245 : vector<1x128xf32>
      %248 = arith.addf %198, %247 : vector<1x128xf32>
      %c208_i32 = arith.constant 208 : i32
      %249 = tpu.dynamic_rotate %79 by %c208_i32 dim 1 : vector<1x256xf32>, i32 -> vector<1x256xf32>
      %c25_i32_112 = arith.constant 25 : i32
      %250 = arith.muli %arg5, %c25_i32_112 : i32
      %c15_i32_113 = arith.constant 15 : i32
      %251 = arith.addi %250, %c15_i32_113 : i32
      %c2_i32_114 = arith.constant 2 : i32
      %252 = arith.addi %251, %c2_i32_114 : i32
      %c0_115 = arith.constant 0 : index
      %253 = arith.index_cast %252 : i32 to index
      %c0_116 = arith.constant 0 : index
      %254 = vector.load %arg3[%c0_115, %253, %c0_116] : memref<1x100x128xf32, #tpu.memory_space<vmem>>, vector<1x1x128xf32>
      %255 = vector.shape_cast %254 : vector<1x1x128xf32> to vector<1x128xf32>
      %256 = vector.extract_strided_slice %249 {offsets = [0, 0], sizes = [1, 128], strides = [1, 1]} : vector<1x256xf32> to vector<1x128xf32>
      %257 = arith.mulf %256, %255 : vector<1x128xf32>
      %258 = arith.addf %208, %257 : vector<1x128xf32>
      %c207_i32 = arith.constant 207 : i32
      %259 = tpu.dynamic_rotate %79 by %c207_i32 dim 1 : vector<1x256xf32>, i32 -> vector<1x256xf32>
      %c25_i32_117 = arith.constant 25 : i32
      %260 = arith.muli %arg5, %c25_i32_117 : i32
      %c15_i32_118 = arith.constant 15 : i32
      %261 = arith.addi %260, %c15_i32_118 : i32
      %c3_i32_119 = arith.constant 3 : i32
      %262 = arith.addi %261, %c3_i32_119 : i32
      %c0_120 = arith.constant 0 : index
      %263 = arith.index_cast %262 : i32 to index
      %c0_121 = arith.constant 0 : index
      %264 = vector.load %arg3[%c0_120, %263, %c0_121] : memref<1x100x128xf32, #tpu.memory_space<vmem>>, vector<1x1x128xf32>
      %265 = vector.shape_cast %264 : vector<1x1x128xf32> to vector<1x128xf32>
      %266 = vector.extract_strided_slice %259 {offsets = [0, 0], sizes = [1, 128], strides = [1, 1]} : vector<1x256xf32> to vector<1x128xf32>
      %267 = arith.mulf %266, %265 : vector<1x128xf32>
      %268 = arith.addf %218, %267 : vector<1x128xf32>
      %c206_i32 = arith.constant 206 : i32
      %269 = tpu.dynamic_rotate %79 by %c206_i32 dim 1 : vector<1x256xf32>, i32 -> vector<1x256xf32>
      %c25_i32_122 = arith.constant 25 : i32
      %270 = arith.muli %arg5, %c25_i32_122 : i32
      %c15_i32_123 = arith.constant 15 : i32
      %271 = arith.addi %270, %c15_i32_123 : i32
      %c4_i32_124 = arith.constant 4 : i32
      %272 = arith.addi %271, %c4_i32_124 : i32
      %c0_125 = arith.constant 0 : index
      %273 = arith.index_cast %272 : i32 to index
      %c0_126 = arith.constant 0 : index
      %274 = vector.load %arg3[%c0_125, %273, %c0_126] : memref<1x100x128xf32, #tpu.memory_space<vmem>>, vector<1x1x128xf32>
      %275 = vector.shape_cast %274 : vector<1x1x128xf32> to vector<1x128xf32>
      %276 = vector.extract_strided_slice %269 {offsets = [0, 0], sizes = [1, 128], strides = [1, 1]} : vector<1x256xf32> to vector<1x128xf32>
      %277 = arith.mulf %276, %275 : vector<1x128xf32>
      %278 = arith.addf %228, %277 : vector<1x128xf32>
      %c194_i32 = arith.constant 194 : i32
      %279 = tpu.dynamic_rotate %79 by %c194_i32 dim 1 : vector<1x256xf32>, i32 -> vector<1x256xf32>
      %c25_i32_127 = arith.constant 25 : i32
      %280 = arith.muli %arg5, %c25_i32_127 : i32
      %c20_i32 = arith.constant 20 : i32
      %281 = arith.addi %280, %c20_i32 : i32
      %c0_i32_128 = arith.constant 0 : i32
      %282 = arith.addi %281, %c0_i32_128 : i32
      %c0_129 = arith.constant 0 : index
      %283 = arith.index_cast %282 : i32 to index
      %c0_130 = arith.constant 0 : index
      %284 = vector.load %arg3[%c0_129, %283, %c0_130] : memref<1x100x128xf32, #tpu.memory_space<vmem>>, vector<1x1x128xf32>
      %285 = vector.shape_cast %284 : vector<1x1x128xf32> to vector<1x128xf32>
      %286 = vector.extract_strided_slice %279 {offsets = [0, 0], sizes = [1, 128], strides = [1, 1]} : vector<1x256xf32> to vector<1x128xf32>
      %287 = arith.mulf %286, %285 : vector<1x128xf32>
      %288 = arith.addf %238, %287 : vector<1x128xf32>
      %c193_i32 = arith.constant 193 : i32
      %289 = tpu.dynamic_rotate %79 by %c193_i32 dim 1 : vector<1x256xf32>, i32 -> vector<1x256xf32>
      %c25_i32_131 = arith.constant 25 : i32
      %290 = arith.muli %arg5, %c25_i32_131 : i32
      %c20_i32_132 = arith.constant 20 : i32
      %291 = arith.addi %290, %c20_i32_132 : i32
      %c1_i32_133 = arith.constant 1 : i32
      %292 = arith.addi %291, %c1_i32_133 : i32
      %c0_134 = arith.constant 0 : index
      %293 = arith.index_cast %292 : i32 to index
      %c0_135 = arith.constant 0 : index
      %294 = vector.load %arg3[%c0_134, %293, %c0_135] : memref<1x100x128xf32, #tpu.memory_space<vmem>>, vector<1x1x128xf32>
      %295 = vector.shape_cast %294 : vector<1x1x128xf32> to vector<1x128xf32>
      %296 = vector.extract_strided_slice %289 {offsets = [0, 0], sizes = [1, 128], strides = [1, 1]} : vector<1x256xf32> to vector<1x128xf32>
      %297 = arith.mulf %296, %295 : vector<1x128xf32>
      %298 = arith.addf %248, %297 : vector<1x128xf32>
      %c192_i32 = arith.constant 192 : i32
      %299 = tpu.dynamic_rotate %79 by %c192_i32 dim 1 : vector<1x256xf32>, i32 -> vector<1x256xf32>
      %c25_i32_136 = arith.constant 25 : i32
      %300 = arith.muli %arg5, %c25_i32_136 : i32
      %c20_i32_137 = arith.constant 20 : i32
      %301 = arith.addi %300, %c20_i32_137 : i32
      %c2_i32_138 = arith.constant 2 : i32
      %302 = arith.addi %301, %c2_i32_138 : i32
      %c0_139 = arith.constant 0 : index
      %303 = arith.index_cast %302 : i32 to index
      %c0_140 = arith.constant 0 : index
      %304 = vector.load %arg3[%c0_139, %303, %c0_140] : memref<1x100x128xf32, #tpu.memory_space<vmem>>, vector<1x1x128xf32>
      %305 = vector.shape_cast %304 : vector<1x1x128xf32> to vector<1x128xf32>
      %306 = vector.extract_strided_slice %299 {offsets = [0, 0], sizes = [1, 128], strides = [1, 1]} : vector<1x256xf32> to vector<1x128xf32>
      %307 = arith.mulf %306, %305 : vector<1x128xf32>
      %308 = arith.addf %258, %307 : vector<1x128xf32>
      %c191_i32 = arith.constant 191 : i32
      %309 = tpu.dynamic_rotate %79 by %c191_i32 dim 1 : vector<1x256xf32>, i32 -> vector<1x256xf32>
      %c25_i32_141 = arith.constant 25 : i32
      %310 = arith.muli %arg5, %c25_i32_141 : i32
      %c20_i32_142 = arith.constant 20 : i32
      %311 = arith.addi %310, %c20_i32_142 : i32
      %c3_i32_143 = arith.constant 3 : i32
      %312 = arith.addi %311, %c3_i32_143 : i32
      %c0_144 = arith.constant 0 : index
      %313 = arith.index_cast %312 : i32 to index
      %c0_145 = arith.constant 0 : index
      %314 = vector.load %arg3[%c0_144, %313, %c0_145] : memref<1x100x128xf32, #tpu.memory_space<vmem>>, vector<1x1x128xf32>
      %315 = vector.shape_cast %314 : vector<1x1x128xf32> to vector<1x128xf32>
      %316 = vector.extract_strided_slice %309 {offsets = [0, 0], sizes = [1, 128], strides = [1, 1]} : vector<1x256xf32> to vector<1x128xf32>
      %317 = arith.mulf %316, %315 : vector<1x128xf32>
      %318 = arith.addf %268, %317 : vector<1x128xf32>
      %c190_i32 = arith.constant 190 : i32
      %319 = tpu.dynamic_rotate %79 by %c190_i32 dim 1 : vector<1x256xf32>, i32 -> vector<1x256xf32>
      %c25_i32_146 = arith.constant 25 : i32
      %320 = arith.muli %arg5, %c25_i32_146 : i32
      %c20_i32_147 = arith.constant 20 : i32
      %321 = arith.addi %320, %c20_i32_147 : i32
      %c4_i32_148 = arith.constant 4 : i32
      %322 = arith.addi %321, %c4_i32_148 : i32
      %c0_149 = arith.constant 0 : index
      %323 = arith.index_cast %322 : i32 to index
      %c0_150 = arith.constant 0 : index
      %324 = vector.load %arg3[%c0_149, %323, %c0_150] : memref<1x100x128xf32, #tpu.memory_space<vmem>>, vector<1x1x128xf32>
      %325 = vector.shape_cast %324 : vector<1x1x128xf32> to vector<1x128xf32>
      %326 = vector.extract_strided_slice %319 {offsets = [0, 0], sizes = [1, 128], strides = [1, 1]} : vector<1x256xf32> to vector<1x128xf32>
      %327 = arith.mulf %326, %325 : vector<1x128xf32>
      %328 = arith.addf %278, %327 : vector<1x128xf32>
      scf.yield %288, %298, %308, %318, %328 : vector<1x128xf32>, vector<1x128xf32>, vector<1x128xf32>, vector<1x128xf32>, vector<1x128xf32>
    }
    %c4_i32_9 = arith.constant 4 : i32
    %c-2_i32 = arith.constant -2 : i32
    %26 = vector.broadcast %c-2_i32 : i32 to vector<1x128xi32>
    %27 = arith.addi %18, %26 : vector<1x128xi32>
    %c0_i32_10 = arith.constant 0 : i32
    %28 = vector.broadcast %c0_i32_10 : i32 to vector<1x128xi32>
    %29 = arith.cmpi sge, %27, %28 : vector<1x128xi32>
    %c-2_i32_11 = arith.constant -2 : i32
    %30 = vector.broadcast %c-2_i32_11 : i32 to vector<1x128xi32>
    %31 = arith.addi %18, %30 : vector<1x128xi32>
    %c16_i32_12 = arith.constant 16 : i32
    %32 = vector.broadcast %c16_i32_12 : i32 to vector<1x128xi32>
    %33 = arith.cmpi slt, %31, %32 : vector<1x128xi32>
    %34 = arith.andi %29, %33 : vector<1x128xi1>
    %cst_13 = arith.constant 0.000000e+00 : f32
    %35 = vector.broadcast %cst_13 : f32 to vector<1x128xf32>
    %36 = arith.select %34, %25#0, %35 : vector<1x128xi1>, vector<1x128xf32>
    %37 = arith.addf %25#2, %36 : vector<1x128xf32>
    %c-1_i32 = arith.constant -1 : i32
    %38 = vector.broadcast %c-1_i32 : i32 to vector<1x128xi32>
    %39 = arith.addi %18, %38 : vector<1x128xi32>
    %c0_i32_14 = arith.constant 0 : i32
    %40 = vector.broadcast %c0_i32_14 : i32 to vector<1x128xi32>
    %41 = arith.cmpi sge, %39, %40 : vector<1x128xi32>
    %c-1_i32_15 = arith.constant -1 : i32
    %42 = vector.broadcast %c-1_i32_15 : i32 to vector<1x128xi32>
    %43 = arith.addi %18, %42 : vector<1x128xi32>
    %c16_i32_16 = arith.constant 16 : i32
    %44 = vector.broadcast %c16_i32_16 : i32 to vector<1x128xi32>
    %45 = arith.cmpi slt, %43, %44 : vector<1x128xi32>
    %46 = arith.andi %41, %45 : vector<1x128xi1>
    %cst_17 = arith.constant 0.000000e+00 : f32
    %47 = vector.broadcast %cst_17 : f32 to vector<1x128xf32>
    %48 = arith.select %46, %25#1, %47 : vector<1x128xi1>, vector<1x128xf32>
    %49 = arith.addf %37, %48 : vector<1x128xf32>
    %c1_i32_18 = arith.constant 1 : i32
    %50 = vector.broadcast %c1_i32_18 : i32 to vector<1x128xi32>
    %51 = arith.addi %18, %50 : vector<1x128xi32>
    %c0_i32_19 = arith.constant 0 : i32
    %52 = vector.broadcast %c0_i32_19 : i32 to vector<1x128xi32>
    %53 = arith.cmpi sge, %51, %52 : vector<1x128xi32>
    %c1_i32_20 = arith.constant 1 : i32
    %54 = vector.broadcast %c1_i32_20 : i32 to vector<1x128xi32>
    %55 = arith.addi %18, %54 : vector<1x128xi32>
    %c16_i32_21 = arith.constant 16 : i32
    %56 = vector.broadcast %c16_i32_21 : i32 to vector<1x128xi32>
    %57 = arith.cmpi slt, %55, %56 : vector<1x128xi32>
    %58 = arith.andi %53, %57 : vector<1x128xi1>
    %cst_22 = arith.constant 0.000000e+00 : f32
    %59 = vector.broadcast %cst_22 : f32 to vector<1x128xf32>
    %60 = arith.select %58, %25#3, %59 : vector<1x128xi1>, vector<1x128xf32>
    %61 = arith.addf %49, %60 : vector<1x128xf32>
    %c2_i32 = arith.constant 2 : i32
    %62 = vector.broadcast %c2_i32 : i32 to vector<1x128xi32>
    %63 = arith.addi %18, %62 : vector<1x128xi32>
    %c0_i32_23 = arith.constant 0 : i32
    %64 = vector.broadcast %c0_i32_23 : i32 to vector<1x128xi32>
    %65 = arith.cmpi sge, %63, %64 : vector<1x128xi32>
    %c2_i32_24 = arith.constant 2 : i32
    %66 = vector.broadcast %c2_i32_24 : i32 to vector<1x128xi32>
    %67 = arith.addi %18, %66 : vector<1x128xi32>
    %c16_i32_25 = arith.constant 16 : i32
    %68 = vector.broadcast %c16_i32_25 : i32 to vector<1x128xi32>
    %69 = arith.cmpi slt, %67, %68 : vector<1x128xi32>
    %70 = arith.andi %65, %69 : vector<1x128xi1>
    %cst_26 = arith.constant 0.000000e+00 : f32
    %71 = vector.broadcast %cst_26 : f32 to vector<1x128xf32>
    %72 = arith.select %70, %25#4, %71 : vector<1x128xi1>, vector<1x128xf32>
    %73 = arith.addf %61, %72 : vector<1x128xf32>
    %74 = vector.shape_cast %73 : vector<1x128xf32> to vector<1x1x128xf32>
    %c0 = arith.constant 0 : index
    %c0_27 = arith.constant 0 : index
    %c0_28 = arith.constant 0 : index
    %75 = vector.load %arg4[%c0, %c0_27, %c0_28] : memref<1x1x128xf32, #tpu.memory_space<vmem>>, vector<1x1x128xf32>
    tpu.vector_store %arg4[%c0, %c0_27, %c0_28], %74 {strides = array<i32>} : memref<1x1x128xf32, #tpu.memory_space<vmem>>, vector<1x1x128xf32>,
    return
  }
  func.func @transform_0(%arg0: i32, %arg1: i32) -> (i32, i32, i32) {
    %c0_i32 = arith.constant 0 : i32
    %c0_i32_0 = arith.constant 0 : i32
    %c0_i32_1 = arith.constant 0 : i32
    return %arg0, %c0_i32, %c0_i32_0 : i32, i32, i32
  }
  func.func @transform_1(%arg0: i32, %arg1: i32) -> (i32, i32, i32) {
    %c0_i32 = arith.constant 0 : i32
    %c0_i32_0 = arith.constant 0 : i32
    return %arg0, %c0_i32, %arg1 : i32, i32, i32
  }
  func.func @transform_2(%arg0: i32, %arg1: i32) -> (i32, i32, i32) {
    %c0_i32 = arith.constant 0 : i32
    %c0_i32_0 = arith.constant 0 : i32
    return %arg0, %c0_i32, %arg1 : i32, i32, i32
  }
}

</mosaic_0001>

<llo_original>
// kernel: tpu_custom_call.1
$region0: #{tpu_custom_call.1}
  #allocation0 [shape = 'u32[]', space=smem, size = 0x4, offset = 0x4, fixed_abs, tag = 'smem constant byte address 0x4 - core index']
  #allocation1 [shape = 'u32[144,128]{1,0:T(1,128)}', space=vmem, size = 0x12000, scoped, tag = 'internal scratch']
  %s0 = inlined_call_operand.vmem [shape: f32[2,4,384], index: 0, kind: input, shape index: {}]
  %s1 = inlined_call_operand.vmem [shape: f32[2,100,256], index: 1, kind: input, shape index: {}]
  %s2 = inlined_call_operand.hbm [shape: f32[2,1,256], index: 2, kind: output, shape index: {}]
  %s3 = sld [smem:[#allocation0]]
  $region86: #{tpu_custom_call.1} parent=0
    _
  %s5 = ssub.s32 1, %s3
  %s6 = scalar_select 0, %s5, %s3
  $region1: #{tpu_custom_call.1} parent=0
    #allocation2 [shape = 'u8[106496]{0}', space=vmem, size = 0x1a000, scoped, tag = 'input window, operand 1']
    #allocation3 [shape = 'u8[1024]{0}', space=vmem, size = 0x400, scoped, tag = 'output window, operand 0']
    #allocation4 [shape = 's32[2]{0}', space=sflag, size = 0x8, scoped, tag = 'scoped memory for tpu_custom_call.1']
    %7 = vsyncpa [#allocation4], 0
    %s8 = scalar_lea.sflag [#allocation4], 1
    %9 = vsyncpa %s8, 0
    loop: start=0, step=1, limit=6
    $region2: #{tpu_custom_call.1} parent=1 // loop_pre_header
      _
    $region3: #{tpu_custom_call.1} parent=1 // loop_header
      %s11 = sphi 0, %s15
      %p12 = scmp.ge.s32.totalorder %s11, 6
      %s18 = sphi 0, %s30
      %s19 = sphi 0, %s26
      %s20 = sphi 0, %s18
      %s21 = sphi 0, %s19
      %s22 = sphi 0, %s20
      %s23 = sphi 0, %s21
      %s33 = sphi 0, %s35
      %s36 = sphi 0, %s33
      %s37 = sphi 0, %s36
      %s53 = sphi 0, %s37
      %s61 = sphi 0, %s63
      %s64 = sphi 0, %s61
      %s65 = sphi 0, %s64
      %s81 = sphi 0, %s65
      %s89 = sphi 0, %s91
      %s92 = sphi 0, %s89
      %s93 = sphi 0, %s92
      %s109 = sphi 0, %s93
    $region4: #{tpu_custom_call.1} parent=1 // loop_header_branch
      %14 = sbr.rel (%p12) target = $region8
    $region5: #{tpu_custom_call.1} parent=1 // loop_body
      %s16 = ssub.s32 %s11, 1
      %s17 = ssub.s32 %s11, 2
      %s24 = sadd.s32 1, %s19
      %p25 = scmp.ge.s32.totalorder %s24, 2
      %s26 = scalar_select %p25, 0, %s24
      %s27 = sadd.s32 1, %s18
      %s28 = scalar_select %p25, %s27, %s18
      %p29 = scmp.ge.s32.totalorder %s28, 2
      %s30 = scalar_select %p29, 0, %s28
      %s31 = ssub.s32 %s18, %s30
      %p32 = scmp.eq.s32.totalorder %s31, 0
      %s34 = sadd.s32 %s33, 1
      %s35 = scalar_select %p32, %s33, %s34
      %p38 = pneg %p32
      %p39 = scmp.eq.s32.totalorder %s11, 3
      %p40 = por %p38, %p39
      %p41 = scmp.ne.s32.totalorder %s33, %s36
      %p42 = scmp.eq.s32.totalorder %s11, 0
      %p43 = por %p41, %p42
      %p44 = scmp.ne.s32.totalorder %s33, %s36
      %p45 = scmp.eq.s32.totalorder %s16, 3
      %p46 = por %p44, %p45
      %p47 = scmp.ne.s32.totalorder %s36, %s37
      %p48 = scmp.eq.s32.totalorder %s16, 0
      %p49 = por %p47, %p48
      %p50 = scmp.ne.s32.totalorder %s36, %s37
      %p51 = scmp.eq.s32.totalorder %s17, 3
      %p52 = por %p50, %p51
      %p54 = scmp.ne.s32.totalorder %s37, %s53
      %p55 = scmp.eq.s32.totalorder %s17, 0
      %p56 = por %p54, %p55
      %s57 = ssub.s32 %s18, %s30
      %s58 = ssub.s32 %s19, %s26
      %s59 = sor.u32 %s57, %s58
      %p60 = scmp.eq.s32.totalorder %s59, 0
      %s62 = sadd.s32 %s61, 1
      %s63 = scalar_select %p60, %s61, %s62
      %p66 = pneg %p60
      %p67 = scmp.eq.s32.totalorder %s11, 3
      %p68 = por %p66, %p67
      %p69 = scmp.ne.s32.totalorder %s61, %s64
      %p70 = scmp.eq.s32.totalorder %s11, 0
      %p71 = por %p69, %p70
      %p72 = scmp.ne.s32.totalorder %s61, %s64
      %p73 = scmp.eq.s32.totalorder %s16, 3
      %p74 = por %p72, %p73
      %p75 = scmp.ne.s32.totalorder %s64, %s65
      %p76 = scmp.eq.s32.totalorder %s16, 0
      %p77 = por %p75, %p76
      %p78 = scmp.ne.s32.totalorder %s64, %s65
      %p79 = scmp.eq.s32.totalorder %s17, 3
      %p80 = por %p78, %p79
      %p82 = scmp.ne.s32.totalorder %s65, %s81
      %p83 = scmp.eq.s32.totalorder %s17, 0
      %p84 = por %p82, %p83
      %s85 = ssub.s32 %s18, %s30
      %s86 = ssub.s32 %s19, %s26
      %s87 = sor.u32 %s85, %s86
      %p88 = scmp.eq.s32.totalorder %s87, 0
      %s90 = sadd.s32 %s89, 1
      %s91 = scalar_select %p88, %s89, %s90
      %p94 = pneg %p88
      %p95 = scmp.eq.s32.totalorder %s11, 3
      %p96 = por %p94, %p95
      %p97 = scmp.ne.s32.totalorder %s89, %s92
      %p98 = scmp.eq.s32.totalorder %s11, 0
      %p99 = por %p97, %p98
      %p100 = scmp.ne.s32.totalorder %s89, %s92
      %p101 = scmp.eq.s32.totalorder %s16, 3
      %p102 = por %p100, %p101
      %p103 = scmp.ne.s32.totalorder %s92, %s93
      %p104 = scmp.eq.s32.totalorder %s16, 0
      %p105 = por %p103, %p104
      %p106 = scmp.ne.s32.totalorder %s92, %s93
      %p107 = scmp.eq.s32.totalorder %s17, 3
      %p108 = por %p106, %p107
      %p110 = scmp.ne.s32.totalorder %s93, %s109
      %p111 = scmp.eq.s32.totalorder %s17, 0
      %p112 = por %p110, %p111
      %p113 = scmp.le.s32.totalorder 1, %s11
      %p114 = scmp.lt.s32.totalorder %s11, 5
      %p115 = pnand %p113, %p114
      %p116 = pneg %p115
      // Predicated region
      $region9: #{tpu_custom_call.1} parent=5 // pred_check
        _
      $region10: #{tpu_custom_call.1} parent=5 // pred_check_branch
        %118 = sbr.rel (%p115) target = $region12
      $region11: #{tpu_custom_call.1} parent=5 // pred_region
        %s119 = ssub.s32 %s11, 1
      $region12: #{tpu_custom_call.1} parent=5 // pred_fallthru
        _
      %p120 = scmp.lt.s32.totalorder %s11, 4
      // Predicated region
      $region13: #{tpu_custom_call.1} parent=5 // pred_check
        %p121 = pneg %p120
      $region14: #{tpu_custom_call.1} parent=5 // pred_check_branch
        %123 = sbr.rel (%p121) target = $region16
      $region15: #{tpu_custom_call.1} parent=5 // pred_region
        // Predicated region
        $region17: #{tpu_custom_call.1} parent=15 // pred_check
          %p124 = pneg %p43
        $region18: #{tpu_custom_call.1} parent=15 // pred_check_branch
          %126 = sbr.rel (%p124) target = $region20
        $region19: #{tpu_custom_call.1} parent=15 // pred_region
          %p127 = scmp.lt.s32.totalorder %s18, 1
          %s128 = scalar_select %p127, %s18, 1
          %s129 = smul.addr %s128, 3
          %s130 = smul.addr %s129, 4
          %s131 = scalar_lea.vmem %s0, %s130
        $region20: #{tpu_custom_call.1} parent=15 // pred_fallthru
          _
        // Predicated region
        $region21: #{tpu_custom_call.1} parent=15 // pred_check
          %p132 = pneg %p71
        $region22: #{tpu_custom_call.1} parent=15 // pred_check_branch
          %134 = sbr.rel (%p132) target = $region24
        $region23: #{tpu_custom_call.1} parent=15 // pred_region
          %s135 = sand.u32 %s61, 1
          %s136 = sand.u32 %s61, 1
          %s137 = smul.addr %s136, 104
          %s138 = scalar_lea.vmem [#allocation2], %s137
          %s139 = smul.addr %s18, 26
          %s140 = sadd.s32 %s19, %s139
          %s141 = smul.addr %s140, 8
          %s142 = scalar_lea.vmem %s1, %s141
          // Predicated region
          $region25: #{tpu_custom_call.1} parent=23 // pred_check
            _
          $region26: #{tpu_custom_call.1} parent=23 // pred_check_branch
            %144 = sbr.rel (0) target = $region28
          $region27: #{tpu_custom_call.1} parent=23 // pred_region
            // Predicated region
            $region29: #{tpu_custom_call.1} parent=27 // pred_check
              _
            $region30: #{tpu_custom_call.1} parent=27 // pred_check_branch
              %146 = sbr.rel (0) target = $region32
            $region31: #{tpu_custom_call.1} parent=27 // pred_region
              // Predicated region
              $region44: #{tpu_custom_call.1} parent=31 // pred_check
                _
              $region45: #{tpu_custom_call.1} parent=31 // pred_check_branch
                %185 = sbr.rel (0) target = $region47
              $region46: #{tpu_custom_call.1} parent=31 // pred_region
                loop: start=0, step=1, limit=1
                $region48: #{tpu_custom_call.1} parent=46 // loop_pre_header
                  _
                $region49: #{tpu_custom_call.1} parent=46 // loop_header
                  %s187 = sphi 0, %s191
                  %p188 = scmp.ge.s32.totalorder %s187, 1
                  %s192 = sphi %s142, %s142
                  %s193 = sphi %s138, %s138
                $region50: #{tpu_custom_call.1} parent=46 // loop_header_branch
                  %190 = sbr.rel (%p188) target = $region54
                $region51: #{tpu_custom_call.1} parent=46 // loop_body
                  %v194 = vld [vmem:[%s192] sm:$0xff]
                  %195 = vst [vmem:[%s193] sm:$0xff] %v194
                  %v196 = vld [vmem:[%s192 + $0x10] sm:$0xff]
                  %197 = vst [vmem:[%s193 + $0x8] sm:$0xff] %v196
                  %v198 = vld [vmem:[%s192 + $0x20] sm:$0xff]
                  %199 = vst [vmem:[%s193 + $0x10] sm:$0xff] %v198
                  %v200 = vld [vmem:[%s192 + $0x30] sm:$0xff]
                  %201 = vst [vmem:[%s193 + $0x18] sm:$0xff] %v200
                  %v202 = vld [vmem:[%s192 + $0x40] sm:$0xff]
                  %203 = vst [vmem:[%s193 + $0x20] sm:$0xff] %v202
                  %v204 = vld [vmem:[%s192 + $0x50] sm:$0xff]
                  %205 = vst [vmem:[%s193 + $0x28] sm:$0xff] %v204
                  %v206 = vld [vmem:[%s192 + $0x60] sm:$0xff]
                  %207 = vst [vmem:[%s193 + $0x30] sm:$0xff] %v206
                  %v208 = vld [vmem:[%s192 + $0x70] sm:$0xff]
                  %209 = vst [vmem:[%s193 + $0x38] sm:$0xff] %v208
                  %v210 = vld [vmem:[%s192 + $0x80] sm:$0xff]
                  %211 = vst [vmem:[%s193 + $0x40] sm:$0xff] %v210
                  %v212 = vld [vmem:[%s192 + $0x90] sm:$0xff]
                  %213 = vst [vmem:[%s193 + $0x48] sm:$0xff] %v212
                  %v214 = vld [vmem:[%s192 + $0xa0] sm:$0xff]
                  %215 = vst [vmem:[%s193 + $0x50] sm:$0xff] %v214
                  %v216 = vld [vmem:[%s192 + $0xb0] sm:$0xff]
                  %217 = vst [vmem:[%s193 + $0x58] sm:$0xff] %v216
                  %v218 = vld [vmem:[%s192 + $0xc0] sm:$0xff]
                  %219 = vst [vmem:[%s193 + $0x60] sm:$0xff] %v218
                $region52: #{tpu_custom_call.1} parent=46 // loop_footer
                  %s191 = sadd.s32 1, %s187
                $region53: #{tpu_custom_call.1} parent=46 // loop_footer_branch
                  %186 = sbr.rel target = $region49
                $region54: #{tpu_custom_call.1} parent=46 // loop_exit
                  _
              $region47: #{tpu_custom_call.1} parent=31 // pred_fallthru
                _
              // Predicated region
              $region55: #{tpu_custom_call.1} parent=31 // pred_check
                _
              $region56: #{tpu_custom_call.1} parent=31 // pred_check_branch
                %221 = sbr.rel target = $region58
              $region57: #{tpu_custom_call.1} parent=31 // pred_region
                _
              $region58: #{tpu_custom_call.1} parent=31 // pred_fallthru
                _
            $region32: #{tpu_custom_call.1} parent=27 // pred_fallthru
              _
            // Predicated region
            $region33: #{tpu_custom_call.1} parent=27 // pred_check
              _
            $region34: #{tpu_custom_call.1} parent=27 // pred_check_branch
              %148 = sbr.rel target = $region36
            $region35: #{tpu_custom_call.1} parent=27 // pred_region
              loop: start=0, step=1, limit=1
              $region37: #{tpu_custom_call.1} parent=35 // loop_pre_header
                _
              $region38: #{tpu_custom_call.1} parent=35 // loop_header
                %s151 = sphi 0, %s155
                %p152 = scmp.ge.s32.totalorder %s151, 1
                %s156 = sphi %s142, %s142
                %s157 = sphi %s138, %s138
              $region39: #{tpu_custom_call.1} parent=35 // loop_header_branch
                %154 = sbr.rel (%p152) target = $region43
              $region40: #{tpu_custom_call.1} parent=35 // loop_body
                %v158 = vld [vmem:[%s156] sm:$0xff]
                %159 = vst [vmem:[%s157] sm:$0xff] %v158
                %v160 = vld [vmem:[%s156 + $0x10] sm:$0xff]
                %161 = vst [vmem:[%s157 + $0x8] sm:$0xff] %v160
                %v162 = vld [vmem:[%s156 + $0x20] sm:$0xff]
                %163 = vst [vmem:[%s157 + $0x10] sm:$0xff] %v162
                %v164 = vld [vmem:[%s156 + $0x30] sm:$0xff]
                %165 = vst [vmem:[%s157 + $0x18] sm:$0xff] %v164
                %v166 = vld [vmem:[%s156 + $0x40] sm:$0xff]
                %167 = vst [vmem:[%s157 + $0x20] sm:$0xff] %v166
                %v168 = vld [vmem:[%s156 + $0x50] sm:$0xff]
                %169 = vst [vmem:[%s157 + $0x28] sm:$0xff] %v168
                %v170 = vld [vmem:[%s156 + $0x60] sm:$0xff]
                %171 = vst [vmem:[%s157 + $0x30] sm:$0xff] %v170
                %v172 = vld [vmem:[%s156 + $0x70] sm:$0xff]
                %173 = vst [vmem:[%s157 + $0x38] sm:$0xff] %v172
                %v174 = vld [vmem:[%s156 + $0x80] sm:$0xff]
                %175 = vst [vmem:[%s157 + $0x40] sm:$0xff] %v174
                %v176 = vld [vmem:[%s156 + $0x90] sm:$0xff]
                %177 = vst [vmem:[%s157 + $0x48] sm:$0xff] %v176
                %v178 = vld [vmem:[%s156 + $0xa0] sm:$0xff]
                %179 = vst [vmem:[%s157 + $0x50] sm:$0xff] %v178
                %v180 = vld [vmem:[%s156 + $0xb0] sm:$0xff]
                %181 = vst [vmem:[%s157 + $0x58] sm:$0xff] %v180
                %v182 = vld [vmem:[%s156 + $0xc0] sm:$0xff]
                %183 = vst [vmem:[%s157 + $0x60] sm:$0xff] %v182
              $region41: #{tpu_custom_call.1} parent=35 // loop_footer
                %s155 = sadd.s32 1, %s151
              $region42: #{tpu_custom_call.1} parent=35 // loop_footer_branch
                %150 = sbr.rel target = $region38
              $region43: #{tpu_custom_call.1} parent=35 // loop_exit
                _
            $region36: #{tpu_custom_call.1} parent=27 // pred_fallthru
              _
          $region28: #{tpu_custom_call.1} parent=23 // pred_fallthru
            _
          %222 = vnop
        $region24: #{tpu_custom_call.1} parent=15 // pred_fallthru
          _
      $region16: #{tpu_custom_call.1} parent=5 // pred_fallthru
        _
      %p223 = scmp.le.s32.totalorder 1, %s11
      %p224 = scmp.lt.s32.totalorder %s11, 5
      %p225 = pnand %p223, %p224
      %p226 = pneg %p225
      // Predicated region
      $region59: #{tpu_custom_call.1} parent=5 // pred_check
        _
      $region60: #{tpu_custom_call.1} parent=5 // pred_check_branch
        %228 = sbr.rel (%p225) target = $region62
      $region61: #{tpu_custom_call.1} parent=5 // pred_region
        %s229 = ssub.s32 %s11, 1
        %s230 = sand.u32 %s64, 1
        %s231 = sand.u32 %s64, 1
        %s232 = smul.addr %s231, 104
        %s233 = scalar_lea.vmem [#allocation2], %s232
        // Predicated region
        $region63: #{tpu_custom_call.1} parent=61 // pred_check
          %p234 = pneg %p77
        $region64: #{tpu_custom_call.1} parent=61 // pred_check_branch
          %236 = sbr.rel (%p234) target = $region66
        $region65: #{tpu_custom_call.1} parent=61 // pred_region
          _
        $region66: #{tpu_custom_call.1} parent=61 // pred_fallthru
          _
        %p237 = scmp.lt.s32.totalorder %s20, 1
        %s238 = scalar_select %p237, %s20, 1
        %s239 = smul.addr %s238, 3
        %s240 = smul.addr %s239, 4
        %s241 = scalar_lea.vmem %s0, %s240
        %p242 = pneg %p49
        %p243 = pneg %p46
        %s244 = sand.u32 %s64, 1
        %s245 = sand.u32 %s64, 1
        %s246 = smul.addr %s245, 104
        %s247 = scalar_lea.vmem [#allocation2], %s246
        %p248 = pneg %p77
        %p249 = pneg %p74
        %p250 = pneg %p105
        %p251 = pneg %p102
        %s252 = sand.u32 %s92, 1
        %s253 = scalar_lea.sflag [#allocation4], %s252
        %s254 = sand.u32 %s92, 1
        %s255 = scalar_lea.vmem [#allocation3], %s254
        %p256 = scmp.lt.s32.totalorder %s20, 1
        %s257 = scalar_select %p256, %s20, 1
        %s258 = smul.addr %s257, 3
        %s259 = smul.addr %s258, 4
        %s260 = scalar_lea.vmem %s0, %s259
        %s261 = smul.u32 %s21, 128
        %v262 = vlaneseq
        %v263 = vand.u32 %v262, 127
        %vm264 = vcmp.lt.s32.totalorder %v263, 0
        %v265 = vsub.s32 0, %v263
        %v266 = vsel %vm264, %v265, %v263
        %v267 = vshrl.u32 %v266, 4
        %v268 = vand.u32 %v266, 15
        %v269 = vsub.s32 0, %v268
        %v270 = vsel %vm264, %v269, %v268
        %vm271 = vcmp.ne.s32.totalorder %v270, 0
        %vm272 = vcmp.lt.s32.totalorder %v270, 0
        %vm273 = vmand %vm272, %vm271
        %v274 = vadd.s32 %v270, 16
        %v275 = vsel %vm273, %v274, %v270
        loop: start=0, step=1, limit=4
        $region67: #{tpu_custom_call.1} parent=61 // loop_pre_header
          _
        $region68: #{tpu_custom_call.1} parent=61 // loop_header
          %s277 = sphi 0, %s281
          %p278 = scmp.ge.s32.totalorder %s277, 4
          %v282 = vphi 0.0, %v534
          %v283 = vphi 0.0, %v545
          %v284 = vphi 0.0, %v556
          %v285 = vphi 0.0, %v567
          %v286 = vphi 0.0, %v578
        $region69: #{tpu_custom_call.1} parent=61 // loop_header_branch
          %280 = sbr.rel (%p278) target = $region73
        $region70: #{tpu_custom_call.1} parent=61 // loop_body
          %s287 = sshra.s32 %s277, 2
          %s288 = sand.u32 %s277, 3
          %s289 = sshra.s32 %s261, 7
          %s290 = sand.u32 %s261, 127
          %s291 = sshra.s32 %s277, 2
          %s292 = sand.u32 %s277, 3
          %s293 = smul.u32 %s287, 3
          %s294 = sadd.s32 %s293, %s289
          %s295 = smul.u32 %s294, 4
          %s296 = sadd.s32 %s295, %s292
          %s297 = scalar_lea.vmem %s260, %s296
          %v298 = vld [vmem:[%s297] ss:$4 sm:$0x3]
          %v300 = vlaneseq
          %v301 = vshrl.u32 %v300, 7
          %v302 = vsub.s32 0, %v301
          %v303 = vrot.slane %v298, %v302
          %v304 = vlaneseq
          %v305 = vshrl.u32 %v304, 7
          %v306 = vsub.s32 1, %v305
          %v307 = vrot.slane %v298, %v306
          %310 = vrot.lane.b32.xlu0 %v303, 2
          %v311 = vpop.permute.xlu0 %310
          %312 = vrot.lane.b32.xlu0 %v307, 2
          %v313 = vpop.permute.xlu0 %312
          %vm314 = vcmp.lt.s32.totalorder %v263, 2
          %v315 = vsel %vm314, %v313, %v311
          %s316 = smul.u32 %s277, 25
          %s317 = scalar_lea.vmem %s233, %s316 [#allocation2]
          %v318 = vld [vmem:[%s317] sm:$0x1]
          %v319 = vmul.f32 %v315, %v318
          %v320 = vadd.f32 %v282, %v319
          %321 = vrot.lane.b32.xlu0 %v303, 1
          %v322 = vpop.permute.xlu0 %321
          %323 = vrot.lane.b32.xlu0 %v307, 1
          %v324 = vpop.permute.xlu0 %323
          %vm325 = vcmp.lt.s32.totalorder %v263, 1
          %v326 = vsel %vm325, %v324, %v322
          %s327 = sadd.s32 %s316, 1
          %s328 = scalar_lea.vmem %s233, %s327 [#allocation2]
          %v329 = vld [vmem:[%s328] sm:$0x1]
          %v330 = vmul.f32 %v326, %v329
          %v331 = vadd.f32 %v283, %v330
          %s332 = sadd.s32 %s316, 2
          %s333 = scalar_lea.vmem %s233, %s332 [#allocation2]
          %v334 = vld [vmem:[%s333] sm:$0x1]
          %v335 = vmul.f32 %v298, %v334
          %v336 = vadd.f32 %v284, %v335
          %337 = vrot.lane.b32.xlu0 %v303, 127
          %v338 = vpop.permute.xlu0 %337
          %339 = vrot.lane.b32.xlu0 %v307, 127
          %v340 = vpop.permute.xlu0 %339
          %vm341 = vcmp.lt.s32.totalorder %v263, 127
          %v342 = vsel %vm341, %v338, %v340
          %s343 = sadd.s32 %s316, 3
          %s344 = scalar_lea.vmem %s233, %s343 [#allocation2]
          %v345 = vld [vmem:[%s344] sm:$0x1]
          %v346 = vmul.f32 %v342, %v345
          %v347 = vadd.f32 %v285, %v346
          %348 = vrot.lane.b32.xlu0 %v303, 126
          %v349 = vpop.permute.xlu0 %348
          %350 = vrot.lane.b32.xlu0 %v307, 126
          %v351 = vpop.permute.xlu0 %350
          %vm352 = vcmp.lt.s32.totalorder %v263, 126
          %v353 = vsel %vm352, %v349, %v351
          %s354 = sadd.s32 %s316, 4
          %s355 = scalar_lea.vmem %s233, %s354 [#allocation2]
          %v356 = vld [vmem:[%s355] sm:$0x1]
          %v357 = vmul.f32 %v353, %v356
          %v358 = vadd.f32 %v286, %v357
          %359 = vrot.lane.b32.xlu0 %v303, 114
          %v360 = vpop.permute.xlu0 %359
          %361 = vrot.lane.b32.xlu0 %v307, 114
          %v362 = vpop.permute.xlu0 %361
          %vm363 = vcmp.lt.s32.totalorder %v263, 114
          %v364 = vsel %vm363, %v360, %v362
          %s365 = sadd.s32 %s316, 5
          %s366 = scalar_lea.vmem %s233, %s365 [#allocation2]
          %v367 = vld [vmem:[%s366] sm:$0x1]
          %v368 = vmul.f32 %v364, %v367
          %v369 = vadd.f32 %v320, %v368
          %370 = vrot.lane.b32.xlu0 %v303, 113
          %v371 = vpop.permute.xlu0 %370
          %372 = vrot.lane.b32.xlu0 %v307, 113
          %v373 = vpop.permute.xlu0 %372
          %vm374 = vcmp.lt.s32.totalorder %v263, 113
          %v375 = vsel %vm374, %v371, %v373
          %s376 = sadd.s32 %s316, 6
          %s377 = scalar_lea.vmem %s233, %s376 [#allocation2]
          %v378 = vld [vmem:[%s377] sm:$0x1]
          %v379 = vmul.f32 %v375, %v378
          %v380 = vadd.f32 %v331, %v379
          %381 = vrot.lane.b32.xlu0 %v303, 112
          %v382 = vpop.permute.xlu0 %381
          %383 = vrot.lane.b32.xlu0 %v307, 112
          %v384 = vpop.permute.xlu0 %383
          %vm385 = vcmp.lt.s32.totalorder %v263, 112
          %v386 = vsel %vm385, %v382, %v384
          %s387 = sadd.s32 %s316, 7
          %s388 = scalar_lea.vmem %s233, %s387 [#allocation2]
          %v389 = vld [vmem:[%s388] sm:$0x1]
          %v390 = vmul.f32 %v386, %v389
          %v391 = vadd.f32 %v336, %v390
          %392 = vrot.lane.b32.xlu0 %v303, 111
          %v393 = vpop.permute.xlu0 %392
          %394 = vrot.lane.b32.xlu0 %v307, 111
          %v395 = vpop.permute.xlu0 %394
          %vm396 = vcmp.lt.s32.totalorder %v263, 111
          %v397 = vsel %vm396, %v393, %v395
          %s398 = sadd.s32 %s316, 8
          %s399 = scalar_lea.vmem %s233, %s398 [#allocation2]
          %v400 = vld [vmem:[%s399] sm:$0x1]
          %v401 = vmul.f32 %v397, %v400
          %v402 = vadd.f32 %v347, %v401
          %403 = vrot.lane.b32.xlu0 %v303, 110
          %v404 = vpop.permute.xlu0 %403
          %405 = vrot.lane.b32.xlu0 %v307, 110
          %v406 = vpop.permute.xlu0 %405
          %vm407 = vcmp.lt.s32.totalorder %v263, 110
          %v408 = vsel %vm407, %v404, %v406
          %s409 = sadd.s32 %s316, 9
          %s410 = scalar_lea.vmem %s233, %s409 [#allocation2]
          %v411 = vld [vmem:[%s410] sm:$0x1]
          %v412 = vmul.f32 %v408, %v411
          %v413 = vadd.f32 %v358, %v412
          %414 = vrot.lane.b32.xlu0 %v303, 98
          %v415 = vpop.permute.xlu0 %414
          %416 = vrot.lane.b32.xlu0 %v307, 98
          %v417 = vpop.permute.xlu0 %416
          %vm418 = vcmp.lt.s32.totalorder %v263, 98
          %v419 = vsel %vm418, %v415, %v417
          %s420 = sadd.s32 %s316, 10
          %s421 = scalar_lea.vmem %s233, %s420 [#allocation2]
          %v422 = vld [vmem:[%s421] sm:$0x1]
          %v423 = vmul.f32 %v419, %v422
          %v424 = vadd.f32 %v369, %v423
          %425 = vrot.lane.b32.xlu0 %v303, 97
          %v426 = vpop.permute.xlu0 %425
          %427 = vrot.lane.b32.xlu0 %v307, 97
          %v428 = vpop.permute.xlu0 %427
          %vm429 = vcmp.lt.s32.totalorder %v263, 97
          %v430 = vsel %vm429, %v426, %v428
          %s431 = sadd.s32 %s316, 11
          %s432 = scalar_lea.vmem %s233, %s431 [#allocation2]
          %v433 = vld [vmem:[%s432] sm:$0x1]
          %v434 = vmul.f32 %v430, %v433
          %v435 = vadd.f32 %v380, %v434
          %436 = vrot.lane.b32.xlu0 %v303, 96
          %v437 = vpop.permute.xlu0 %436
          %438 = vrot.lane.b32.xlu0 %v307, 96
          %v439 = vpop.permute.xlu0 %438
          %vm440 = vcmp.lt.s32.totalorder %v263, 96
          %v441 = vsel %vm440, %v437, %v439
          %s442 = sadd.s32 %s316, 12
          %s443 = scalar_lea.vmem %s233, %s442 [#allocation2]
          %v444 = vld [vmem:[%s443] sm:$0x1]
          %v445 = vmul.f32 %v441, %v444
          %v446 = vadd.f32 %v391, %v445
          %447 = vrot.lane.b32.xlu0 %v303, 95
          %v448 = vpop.permute.xlu0 %447
          %449 = vrot.lane.b32.xlu0 %v307, 95
          %v450 = vpop.permute.xlu0 %449
          %vm451 = vcmp.lt.s32.totalorder %v263, 95
          %v452 = vsel %vm451, %v448, %v450
          %s453 = sadd.s32 %s316, 13
          %s454 = scalar_lea.vmem %s233, %s453 [#allocation2]
          %v455 = vld [vmem:[%s454] sm:$0x1]
          %v456 = vmul.f32 %v452, %v455
          %v457 = vadd.f32 %v402, %v456
          %458 = vrot.lane.b32.xlu0 %v303, 94
          %v459 = vpop.permute.xlu0 %458
          %460 = vrot.lane.b32.xlu0 %v307, 94
          %v461 = vpop.permute.xlu0 %460
          %vm462 = vcmp.lt.s32.totalorder %v263, 94
          %v463 = vsel %vm462, %v459, %v461
          %s464 = sadd.s32 %s316, 14
          %s465 = scalar_lea.vmem %s233, %s464 [#allocation2]
          %v466 = vld [vmem:[%s465] sm:$0x1]
          %v467 = vmul.f32 %v463, %v466
          %v468 = vadd.f32 %v413, %v467
          %469 = vrot.lane.b32.xlu0 %v303, 82
          %v470 = vpop.permute.xlu0 %469
          %471 = vrot.lane.b32.xlu0 %v307, 82
          %v472 = vpop.permute.xlu0 %471
          %vm473 = vcmp.lt.s32.totalorder %v263, 82
          %v474 = vsel %vm473, %v470, %v472
          %s475 = sadd.s32 %s316, 15
          %s476 = scalar_lea.vmem %s233, %s475 [#allocation2]
          %v477 = vld [vmem:[%s476] sm:$0x1]
          %v478 = vmul.f32 %v474, %v477
          %v479 = vadd.f32 %v424, %v478
          %480 = vrot.lane.b32.xlu0 %v303, 81
          %v481 = vpop.permute.xlu0 %480
          %482 = vrot.lane.b32.xlu0 %v307, 81
          %v483 = vpop.permute.xlu0 %482
          %vm484 = vcmp.lt.s32.totalorder %v263, 81
          %v485 = vsel %vm484, %v481, %v483
          %s486 = sadd.s32 %s316, 16
          %s487 = scalar_lea.vmem %s233, %s486 [#allocation2]
          %v488 = vld [vmem:[%s487] sm:$0x1]
          %v489 = vmul.f32 %v485, %v488
          %v490 = vadd.f32 %v435, %v489
          %491 = vrot.lane.b32.xlu0 %v303, 80
          %v492 = vpop.permute.xlu0 %491
          %493 = vrot.lane.b32.xlu0 %v307, 80
          %v494 = vpop.permute.xlu0 %493
          %vm495 = vcmp.lt.s32.totalorder %v263, 80
          %v496 = vsel %vm495, %v492, %v494
          %s497 = sadd.s32 %s316, 17
          %s498 = scalar_lea.vmem %s233, %s497 [#allocation2]
          %v499 = vld [vmem:[%s498] sm:$0x1]
          %v500 = vmul.f32 %v496, %v499
          %v501 = vadd.f32 %v446, %v500
          %502 = vrot.lane.b32.xlu0 %v303, 79
          %v503 = vpop.permute.xlu0 %502
          %504 = vrot.lane.b32.xlu0 %v307, 79
          %v505 = vpop.permute.xlu0 %504
          %vm506 = vcmp.lt.s32.totalorder %v263, 79
          %v507 = vsel %vm506, %v503, %v505
          %s508 = sadd.s32 %s316, 18
          %s509 = scalar_lea.vmem %s233, %s508 [#allocation2]
          %v510 = vld [vmem:[%s509] sm:$0x1]
          %v511 = vmul.f32 %v507, %v510
          %v512 = vadd.f32 %v457, %v511
          %513 = vrot.lane.b32.xlu0 %v303, 78
          %v514 = vpop.permute.xlu0 %513
          %515 = vrot.lane.b32.xlu0 %v307, 78
          %v516 = vpop.permute.xlu0 %515
          %vm517 = vcmp.lt.s32.totalorder %v263, 78
          %v518 = vsel %vm517, %v514, %v516
          %s519 = sadd.s32 %s316, 19
          %s520 = scalar_lea.vmem %s233, %s519 [#allocation2]
          %v521 = vld [vmem:[%s520] sm:$0x1]
          %v522 = vmul.f32 %v518, %v521
          %v523 = vadd.f32 %v468, %v522
          %524 = vrot.lane.b32.xlu0 %v303, 66
          %v525 = vpop.permute.xlu0 %524
          %526 = vrot.lane.b32.xlu0 %v307, 66
          %v527 = vpop.permute.xlu0 %526
          %vm528 = vcmp.lt.s32.totalorder %v263, 66
          %v529 = vsel %vm528, %v525, %v527
          %s530 = sadd.s32 %s316, 20
          %s531 = scalar_lea.vmem %s233, %s530 [#allocation2]
          %v532 = vld [vmem:[%s531] sm:$0x1]
          %v533 = vmul.f32 %v529, %v532
          %v534 = vadd.f32 %v479, %v533
          %535 = vrot.lane.b32.xlu0 %v303, 65
          %v536 = vpop.permute.xlu0 %535
          %537 = vrot.lane.b32.xlu0 %v307, 65
          %v538 = vpop.permute.xlu0 %537
          %vm539 = vcmp.lt.s32.totalorder %v263, 65
          %v540 = vsel %vm539, %v536, %v538
          %s541 = sadd.s32 %s316, 21
          %s542 = scalar_lea.vmem %s233, %s541 [#allocation2]
          %v543 = vld [vmem:[%s542] sm:$0x1]
          %v544 = vmul.f32 %v540, %v543
          %v545 = vadd.f32 %v490, %v544
          %546 = vrot.lane.b32.xlu0 %v303, 64
          %v547 = vpop.permute.xlu0 %546
          %548 = vrot.lane.b32.xlu0 %v307, 64
          %v549 = vpop.permute.xlu0 %548
          %vm550 = vcmp.lt.s32.totalorder %v263, 64
          %v551 = vsel %vm550, %v547, %v549
          %s552 = sadd.s32 %s316, 22
          %s553 = scalar_lea.vmem %s233, %s552 [#allocation2]
          %v554 = vld [vmem:[%s553] sm:$0x1]
          %v555 = vmul.f32 %v551, %v554
          %v556 = vadd.f32 %v501, %v555
          %557 = vrot.lane.b32.xlu0 %v303, 63
          %v558 = vpop.permute.xlu0 %557
          %559 = vrot.lane.b32.xlu0 %v307, 63
          %v560 = vpop.permute.xlu0 %559
          %vm561 = vcmp.lt.s32.totalorder %v263, 63
          %v562 = vsel %vm561, %v558, %v560
          %s563 = sadd.s32 %s316, 23
          %s564 = scalar_lea.vmem %s233, %s563 [#allocation2]
          %v565 = vld [vmem:[%s564] sm:$0x1]
          %v566 = vmul.f32 %v562, %v565
          %v567 = vadd.f32 %v512, %v566
          %568 = vrot.lane.b32.xlu0 %v303, 62
          %v569 = vpop.permute.xlu0 %568
          %570 = vrot.lane.b32.xlu0 %v307, 62
          %v571 = vpop.permute.xlu0 %570
          %vm572 = vcmp.lt.s32.totalorder %v263, 62
          %v573 = vsel %vm572, %v569, %v571
          %s574 = sadd.s32 %s316, 24
          %s575 = scalar_lea.vmem %s233, %s574 [#allocation2]
          %v576 = vld [vmem:[%s575] sm:$0x1]
          %v577 = vmul.f32 %v573, %v576
          %v578 = vadd.f32 %v523, %v577
        $region71: #{tpu_custom_call.1} parent=61 // loop_footer
          %s281 = sadd.s32 1, %s277
        $region72: #{tpu_custom_call.1} parent=61 // loop_footer_branch
          %276 = sbr.rel target = $region68
        $region73: #{tpu_custom_call.1} parent=61 // loop_exit
          _
        %v579 = vadd.s32 %v275, 4294967294
        %vm580 = vcmp.ge.s32.totalorder %v579, 0
        %vm581 = vcmp.lt.s32.totalorder %v579, 16
        %vm582 = vmand %vm580, %vm581
        %v583 = vsel %vm582, %v282, 0.0
        %v584 = vadd.f32 %v284, %v583
        %v585 = vadd.s32 %v275, 4294967295
        %vm586 = vcmp.ge.s32.totalorder %v585, 0
        %vm587 = vcmp.lt.s32.totalorder %v585, 16
        %vm588 = vmand %vm586, %vm587
        %v589 = vsel %vm588, %v283, 0.0
        %v590 = vadd.f32 %v584, %v589
        %v591 = vadd.s32 %v275, 1
        %vm592 = vcmp.ge.s32.totalorder %v591, 0
        %vm593 = vcmp.lt.s32.totalorder %v591, 16
        %vm594 = vmand %vm592, %vm593
        %v595 = vsel %vm594, %v285, 0.0
        %v596 = vadd.f32 %v590, %v595
        %v597 = vadd.s32 %v275, 2
        %vm598 = vcmp.ge.s32.totalorder %v597, 0
        %vm599 = vcmp.lt.s32.totalorder %v597, 16
        %vm600 = vmand %vm598, %vm599
        %v601 = vsel %vm600, %v286, 0.0
        %v602 = vadd.f32 %v596, %v601
        %603 = vst [vmem:[%s255] sm:$0x1] %v602
        %s604 = sand.u32 %s92, 1
        %s605 = scalar_lea.sflag [#allocation4], %s604
        %s606 = sand.u32 %s92, 1
        %s607 = scalar_lea.vmem [#allocation3], %s606
        // Predicated region
        $region74: #{tpu_custom_call.1} parent=61 // pred_check
          %p608 = pneg %p102
        $region75: #{tpu_custom_call.1} parent=61 // pred_check_branch
          %610 = sbr.rel (%p608) target = $region77
        $region76: #{tpu_custom_call.1} parent=61 // pred_region
          %s612 = ssub.s32 16, 16
          %613 = vsyncadd %s605, %s612
          %s614 = smul.addr %s20, 2
          %s615 = sadd.s32 %s21, %s614
          %s616 = smul.addr %s615, 16
          %s617 = scalar_lea.hbm %s2, %s616
          %s619 = sshll.u32 %s607, 4
          %s620 = int_to_ptr.vmem [resolvable:$true] %s619
          %622 = dma.vmem_to_hbm [thread:$0]  %s620, 16, %s617, %s605
        $region77: #{tpu_custom_call.1} parent=61 // pred_fallthru
          _
      $region62: #{tpu_custom_call.1} parent=5 // pred_fallthru
        _
      %p623 = scmp.le.s32.totalorder 2, %s11
      // Predicated region
      $region78: #{tpu_custom_call.1} parent=5 // pred_check
        %p624 = pneg %p623
      $region79: #{tpu_custom_call.1} parent=5 // pred_check_branch
        %626 = sbr.rel (%p624) target = $region81
      $region80: #{tpu_custom_call.1} parent=5 // pred_region
        %s627 = ssub.s32 %s11, 2
        // Predicated region
        $region82: #{tpu_custom_call.1} parent=80 // pred_check
          %p628 = pneg %p108
        $region83: #{tpu_custom_call.1} parent=80 // pred_check_branch
          %630 = sbr.rel (%p628) target = $region85
        $region84: #{tpu_custom_call.1} parent=80 // pred_region
          %s631 = sand.u32 %s93, 1
          %s632 = scalar_lea.sflag [#allocation4], %s631
          %s633 = sand.u32 %s93, 1
          %s634 = scalar_lea.vmem [#allocation3], %s633
          %635 = dma.done %s632, 16
        $region85: #{tpu_custom_call.1} parent=80 // pred_fallthru
          _
      $region81: #{tpu_custom_call.1} parent=5 // pred_fallthru
        _
    $region6: #{tpu_custom_call.1} parent=1 // loop_footer
      %s15 = sadd.s32 1, %s11
    $region7: #{tpu_custom_call.1} parent=1 // loop_footer_branch
      %10 = sbr.rel target = $region3
    $region8: #{tpu_custom_call.1} parent=1 // loop_exit
      _
    %636 = vsyncpa [#allocation4], 1
    %s637 = scalar_lea.sflag [#allocation4], 1
    %638 = vsyncpa %s637, 1

</llo_original>
